<compile_context>
chip_gen: v7x
topology: tpu7x:2x2x1
jax: 0.10.0
libtpu: 0.0.40
codegen_flags: <defaults>
</compile_context>

<pallas_src>
import jax
import jax.numpy as jnp
from jax.experimental import pallas as pl
from jax.experimental.pallas import tpu as pltpu


def _round_up(n: int, m: int) -> int:
    return ((n + m - 1) // m) * m


def qnet_kernel(x_ref, w1_ref, b1_ref, w2_ref, b2_ref, addmask_ref, o_ref):
    # fc1 (bf16 MXU matmul, f32 accumulation) + bias + ReLU in f32
    h = jnp.dot(x_ref[...], w1_ref[...], preferred_element_type=jnp.float32)
    h = jnp.maximum(h + b1_ref[...], 0.0)
    # fc2 (cast activations to bf16 for the MXU, accumulate f32)
    q = jnp.dot(h.astype(jnp.bfloat16), w2_ref[...],
                preferred_element_type=jnp.float32)
    # single-add epilogue: bias + pre-scaled additive mask
    o_ref[...] = q + b2_ref[...] + addmask_ref[...]


def prepare_params(w1, b1, w2, b2):
    """Pad weights/biases to 128-lane-dense shapes and cast weights to bf16.

    w1: [S, H], b1: [1, H], w2: [H, A], b2: [1, A] (f32-like inputs).
    Done once at init time, not per forward call.
    """
    S, H = w1.shape
    A = w2.shape[1]
    Sp, Hp, Ap = _round_up(S, 128), _round_up(H, 128), _round_up(A, 128)

    w1p = jnp.zeros((Sp, Hp), jnp.bfloat16).at[:S, :H].set(w1.astype(jnp.bfloat16))
    b1p = jnp.zeros((1, Hp), jnp.float32).at[:, :H].set(b1.astype(jnp.float32))
    w2p = jnp.zeros((Hp, Ap), jnp.bfloat16).at[:H, :A].set(w2.astype(jnp.bfloat16))
    b2p = jnp.zeros((1, Ap), jnp.float32).at[:, :A].set(b2.astype(jnp.float32))
    return w1p, b1p, w2p, b2p


def qnet_forward(x, w1p, b1p, w2p, b2p, add_mask, *, block_b=256):
    """x: [B, S] f32/bf16; padded params from prepare_params;
    add_mask: [B, A] additive mask (already action_mask * -1e9). Returns [B, A] f32."""
    B, S = x.shape
    A = add_mask.shape[1]
    Sp, Hp = w1p.shape
    Ap = w2p.shape[1]

    # Batch tile: multiple of 8 sublanes; cap at block_b; pad B up to a tile multiple.
    TB = min(block_b, _round_up(B, 8))
    Bp = _round_up(B, TB)

    xp = jnp.zeros((Bp, Sp), jnp.bfloat16).at[:B, :S].set(x.astype(jnp.bfloat16))
    mp = jnp.zeros((Bp, Ap), jnp.float32).at[:B, :A].set(add_mask.astype(jnp.float32))

    grid = (Bp // TB,)

    out = pl.pallas_call(
        qnet_kernel,
        out_shape=jax.ShapeDtypeStruct((Bp, Ap), jnp.float32),
        grid=grid,
        in_specs=[
            pl.BlockSpec((TB, Sp), lambda i: (i, 0)),   # x: batch-tiled
            pl.BlockSpec((Sp, Hp), lambda i: (0, 0)),   # w1: VMEM-resident
            pl.BlockSpec((1, Hp), lambda i: (0, 0)),    # b1: resident
            pl.BlockSpec((Hp, Ap), lambda i: (0, 0)),   # w2: resident
            pl.BlockSpec((1, Ap), lambda i: (0, 0)),    # b2: resident
            pl.BlockSpec((TB, Ap), lambda i: (i, 0)),   # additive mask: batch-tiled
        ],
        out_specs=pl.BlockSpec((TB, Ap), lambda i: (i, 0)),
        compiler_params=pltpu.CompilerParams(
            dimension_semantics=("parallel",),          # 2 TCs on v7x; no-op on v5e/v6e
            vmem_limit_bytes=32 * 1024 * 1024,          # well under v7x's 64 MiB physical
        ),
    )(xp, w1p, b1p, w2p, b2p, mp)

    return out[:B, :A]


def init_params(key, state_dim, hidden_dim, action_dim):
    # Deterministic init mimicking torch.nn.Linear's U(-1/sqrt(fan_in), 1/sqrt(fan_in)).
    k1, k2, k3, k4 = jax.random.split(key, 4)
    bound1 = 1.0 / jnp.sqrt(state_dim)
    bound2 = 1.0 / jnp.sqrt(hidden_dim)
    w1 = jax.random.uniform(k1, (state_dim, hidden_dim), jnp.float32, -bound1, bound1)
    b1 = jax.random.uniform(k2, (1, hidden_dim), jnp.float32, -bound1, bound1)
    w2 = jax.random.uniform(k3, (hidden_dim, action_dim), jnp.float32, -bound2, bound2)
    b2 = jax.random.uniform(k4, (1, action_dim), jnp.float32, -bound2, bound2)
    return w1, b1, w2, b2


def _reference(x, w1, b1, w2, b2, add_mask):
    # Matches the kernel's numerics: bf16 MXU inputs, f32 accumulation/epilogue.
    xb = x.astype(jnp.bfloat16)
    h = jnp.dot(xb, w1.astype(jnp.bfloat16), preferred_element_type=jnp.float32)
    h = jnp.maximum(h + b1, 0.0)
    q = jnp.dot(h.astype(jnp.bfloat16), w2.astype(jnp.bfloat16),
                preferred_element_type=jnp.float32)
    return q + b2 + add_mask


if __name__ == "__main__":
    key = jax.random.PRNGKey(0)
    B, state_dim, hidden_dim, action_dim = 8, 32, 64, 16

    kx, km, kp, kx2, km2 = jax.random.split(key, 5)
    x = jax.random.normal(kx, (B, state_dim), jnp.float32)
    # action_mask: 1.0 for invalid actions (to be masked), 0.0 for valid.
    action_mask = jax.random.bernoulli(km, 0.3, (B, action_dim)).astype(jnp.float32)
    # Pre-scale the mask ONCE where it is created (kernel does a single add).
    add_mask = action_mask * jnp.float32(-1.0e9)

    w1, b1, w2, b2 = init_params(kp, state_dim, hidden_dim, action_dim)
    w1p, b1p, w2p, b2p = prepare_params(w1, b1, w2, b2)

    out = qnet_forward(x, w1p, b1p, w2p, b2p, add_mask)
    out = jax.block_until_ready(out)

    ref = _reference(x, w1, b1, w2, b2, add_mask)
    assert out.shape == (B, action_dim)
    assert jnp.allclose(out, ref, atol=1e-3, rtol=1e-3)
    # Loose check against a pure-f32 reference (bf16 MXU inputs lose ~3 digits).
    ref_f32 = jnp.maximum(x @ w1 + b1, 0.0) @ w2 + b2 + add_mask
    assert jnp.allclose(out, ref_f32, atol=5e-2, rtol=5e-2)

    # Second call with a larger batch to exercise the multi-tile batch grid.
    B2 = 260
    x2 = jax.random.normal(kx2, (B2, state_dim), jnp.float32)
    am2 = jax.random.bernoulli(km2, 0.3, (B2, action_dim)).astype(jnp.float32)
    add_mask2 = am2 * jnp.float32(-1.0e9)
    out2 = jax.block_until_ready(qnet_forward(x2, w1p, b1p, w2p, b2p, add_mask2))
    ref2 = _reference(x2, w1, b1, w2, b2, add_mask2)
    assert out2.shape == (B2, action_dim)
    assert jnp.allclose(out2, ref2, atol=1e-3, rtol=1e-3)

    # TODO(synk): for tiny deployment batches, fuse the surrounding DQN step
    # (argmax / target-Q) or batch many environments per call to amortize launch cost.
    print("KERNEL_OK")
</pallas_src>

<mosaic_0001>
module attributes {stable_mosaic.version = 11 : i64} {
  func.func @qnet_kernel(%arg0: i32, %arg1: memref<8x128xbf16, #tpu.memory_space<vmem>>, %arg2: memref<128x128xbf16, #tpu.memory_space<vmem>>, %arg3: memref<1x128xf32, #tpu.memory_space<vmem>>, %arg4: memref<128x128xbf16, #tpu.memory_space<vmem>>, %arg5: memref<1x128xf32, #tpu.memory_space<vmem>>, %arg6: memref<8x128xf32, #tpu.memory_space<vmem>>, %arg7: memref<8x128xf32, #tpu.memory_space<vmem>>) attributes {dimension_semantics = [#tpu.dimension_semantics<parallel>], iteration_bounds = array<i64: 1>, scalar_prefetch = 0 : i64, scratch_operands = 0 : i64, tpu.core_type = #tpu.core_type<tc>, window_params = [{transform_indices = @transform_0, window_bounds = array<i64: 8, 128>}, {pipeline_mode = #tpu.pipeline_mode<synchronous>, transform_indices = @transform_1, window_bounds = array<i64: 128, 128>}, {pipeline_mode = #tpu.pipeline_mode<synchronous>, transform_indices = @transform_2, window_bounds = array<i64: 1, 128>}, {pipeline_mode = #tpu.pipeline_mode<synchronous>, transform_indices = @transform_3, window_bounds = array<i64: 128, 128>}, {pipeline_mode = #tpu.pipeline_mode<synchronous>, transform_indices = @transform_4, window_bounds = array<i64: 1, 128>}, {transform_indices = @transform_5, window_bounds = array<i64: 8, 128>}, {transform_indices = @transform_6, window_bounds = array<i64: 8, 128>}]} {
    %c0 = arith.constant 0 : index
    %c0_0 = arith.constant 0 : index
    %0 = vector.load %arg1[%c0, %c0_0] : memref<8x128xbf16, #tpu.memory_space<vmem>>, vector<8x128xbf16>
    %c0_1 = arith.constant 0 : index
    %c0_2 = arith.constant 0 : index
    %1 = vector.load %arg2[%c0_1, %c0_2] : memref<128x128xbf16, #tpu.memory_space<vmem>>, vector<128x128xbf16>
    %cst = arith.constant dense<0.000000e+00> : vector<8x128xf32>
    %2 = tpu.matmul %0, %1, %cst {dimension_numbers = #tpu.dot_dimension_numbers<[1], [0], [0], [1], [0, 0, 1, 1], [], []>} : vector<8x128xbf16>, vector<128x128xbf16>, vector<8x128xf32> -> vector<8x128xf32>
    %c0_3 = arith.constant 0 : index
    %c0_4 = arith.constant 0 : index
    %3 = vector.load %arg3[%c0_3, %c0_4] : memref<1x128xf32, #tpu.memory_space<vmem>>, vector<1x128xf32>
    %4 = vector.broadcast %3 : vector<1x128xf32> to vector<8x128xf32>
    %5 = arith.addf %2, %4 : vector<8x128xf32>
    %cst_5 = arith.constant 0.000000e+00 : f32
    %6 = vector.broadcast %cst_5 : f32 to vector<8x128xf32>
    %7 = arith.maximumf %5, %6 : vector<8x128xf32>
    %8 = arith.truncf %7 : vector<8x128xf32> to vector<8x128xbf16>
    %c0_6 = arith.constant 0 : index
    %c0_7 = arith.constant 0 : index
    %9 = vector.load %arg4[%c0_6, %c0_7] : memref<128x128xbf16, #tpu.memory_space<vmem>>, vector<128x128xbf16>
    %cst_8 = arith.constant dense<0.000000e+00> : vector<8x128xf32>
    %10 = tpu.matmul %8, %9, %cst_8 {dimension_numbers = #tpu.dot_dimension_numbers<[1], [0], [0], [1], [0, 0, 1, 1], [], []>} : vector<8x128xbf16>, vector<128x128xbf16>, vector<8x128xf32> -> vector<8x128xf32>
    %c0_9 = arith.constant 0 : index
    %c0_10 = arith.constant 0 : index
    %11 = vector.load %arg5[%c0_9, %c0_10] : memref<1x128xf32, #tpu.memory_space<vmem>>, vector<1x128xf32>
    %12 = vector.broadcast %11 : vector<1x128xf32> to vector<8x128xf32>
    %13 = arith.addf %10, %12 : vector<8x128xf32>
    %c0_11 = arith.constant 0 : index
    %c0_12 = arith.constant 0 : index
    %14 = vector.load %arg6[%c0_11, %c0_12] : memref<8x128xf32, #tpu.memory_space<vmem>>, vector<8x128xf32>
    %15 = arith.addf %13, %14 : vector<8x128xf32>
    %c0_13 = arith.constant 0 : index
    %c0_14 = arith.constant 0 : index
    %16 = vector.load %arg7[%c0_13, %c0_14] : memref<8x128xf32, #tpu.memory_space<vmem>>, vector<8x128xf32>
    tpu.vector_store %arg7[%c0_13, %c0_14], %15 {strides = array<i32>} : memref<8x128xf32, #tpu.memory_space<vmem>>, vector<8x128xf32>,
    return
  }
  func.func @transform_0(%arg0: i32) -> (i32, i32) {
    %c0_i32 = arith.constant 0 : i32
    %c0_i32_0 = arith.constant 0 : i32
    return %arg0, %c0_i32 : i32, i32
  }
  func.func @transform_1(%arg0: i32) -> (i32, i32) {
    %c0_i32 = arith.constant 0 : i32
    %c0_i32_0 = arith.constant 0 : i32
    %c0_i32_1 = arith.constant 0 : i32
    return %c0_i32, %c0_i32_0 : i32, i32
  }
  func.func @transform_2(%arg0: i32) -> (i32, i32) {
    %c0_i32 = arith.constant 0 : i32
    %c0_i32_0 = arith.constant 0 : i32
    %c0_i32_1 = arith.constant 0 : i32
    return %c0_i32, %c0_i32_0 : i32, i32
  }
  func.func @transform_3(%arg0: i32) -> (i32, i32) {
    %c0_i32 = arith.constant 0 : i32
    %c0_i32_0 = arith.constant 0 : i32
    %c0_i32_1 = arith.constant 0 : i32
    return %c0_i32, %c0_i32_0 : i32, i32
  }
  func.func @transform_4(%arg0: i32) -> (i32, i32) {
    %c0_i32 = arith.constant 0 : i32
    %c0_i32_0 = arith.constant 0 : i32
    %c0_i32_1 = arith.constant 0 : i32
    return %c0_i32, %c0_i32_0 : i32, i32
  }
  func.func @transform_5(%arg0: i32) -> (i32, i32) {
    %c0_i32 = arith.constant 0 : i32
    %c0_i32_0 = arith.constant 0 : i32
    return %arg0, %c0_i32 : i32, i32
  }
  func.func @transform_6(%arg0: i32) -> (i32, i32) {
    %c0_i32 = arith.constant 0 : i32
    %c0_i32_0 = arith.constant 0 : i32
    return %arg0, %c0_i32 : i32, i32
  }
}

</mosaic_0001>

<llo_original>
// kernel: tpu_custom_call.1
$region0: #{tpu_custom_call.1}
  #allocation0 [shape = 'u32[]', space=smem, size = 0x4, offset = 0x4, fixed_abs, tag = 'smem constant byte address 0x4 - core index']
  #allocation1 [shape = 'u32[144,128]{1,0:T(1,128)}', space=vmem, size = 0x12000, scoped, tag = 'internal scratch']
  %s0 = inlined_call_operand.hbm [shape: bf16[8,128], index: 0, kind: input, shape index: {}]
  %s1 = inlined_call_operand.hbm [shape: bf16[128,128], index: 1, kind: input, shape index: {}]
  %s2 = inlined_call_operand.vmem [shape: f32[1,128], index: 2, kind: input, shape index: {}]
  %s3 = inlined_call_operand.hbm [shape: bf16[128,128], index: 3, kind: input, shape index: {}]
  %s4 = inlined_call_operand.vmem [shape: f32[1,128], index: 4, kind: input, shape index: {}]
  %s5 = inlined_call_operand.vmem [shape: f32[8,128], index: 5, kind: input, shape index: {}]
  %s6 = inlined_call_operand.hbm [shape: f32[8,128], index: 6, kind: output, shape index: {}]
  %s7 = sld [smem:[#allocation0]]
  $region46: #{tpu_custom_call.1} parent=0
    _
  %s9 = ssub.s32 1, %s7
  %s10 = scalar_select 0, %s9, %s7
  $region1: #{tpu_custom_call.1} parent=0
    #allocation2 [shape = 'u8[2048]{0}', space=vmem, size = 0x800, scoped, tag = 'input window, operand 0, single buffered']
    #allocation3 [shape = 's32[1]{0}', space=sflag, size = 0x4, scoped, tag = 'scoped memory for tpu_custom_call.1']
    #allocation4 [shape = 's32[1]{0}', space=sflag, size = 0x4, scoped, tag = 'scoped memory for tpu_custom_call.1']
    #allocation5 [shape = 'u8[32768]{0}', space=vmem, size = 0x8000, scoped, tag = 'input window, operand 1, single buffered']
    #allocation6 [shape = 's32[1]{0}', space=sflag, size = 0x4, scoped, tag = 'scoped memory for tpu_custom_call.1']
    #allocation7 [shape = 'u8[32768]{0}', space=vmem, size = 0x8000, scoped, tag = 'input window, operand 3, single buffered']
    #allocation8 [shape = 'u8[4096]{0}', space=vmem, size = 0x1000, scoped, tag = 'output window, operand 0, single buffered']
    %11 = vsyncpa [#allocation3], 0
    %12 = vsyncpa [#allocation6], 0
    %13 = vsyncpa [#allocation4], 0
    // Predicated region
    $region2: #{tpu_custom_call.1} parent=1 // pred_check
      _
    $region3: #{tpu_custom_call.1} parent=1 // pred_check_branch
      %15 = sbr.rel (0) target = $region5
    $region4: #{tpu_custom_call.1} parent=1 // pred_region
      %s17 = ssub.s32 64, 64
      %18 = vsyncadd [#allocation3], %s17
      %s20 = sshll.u32 [#allocation2], 4
      %s21 = int_to_ptr.vmem [resolvable:$true] %s20
      %23 = dma.hbm_to_vmem [thread:$0]  %s0, 64, %s21, [#allocation3]
    $region5: #{tpu_custom_call.1} parent=1 // pred_fallthru
      _
    // Predicated region
    $region6: #{tpu_custom_call.1} parent=1 // pred_check
      _
    $region7: #{tpu_custom_call.1} parent=1 // pred_check_branch
      %25 = sbr.rel (0) target = $region9
    $region8: #{tpu_custom_call.1} parent=1 // pred_region
      %s27 = ssub.s32 1024, 1024
      %28 = vsyncadd [#allocation6], %s27
      %s29 = sshll.u32 [#allocation5], 4
      %s30 = int_to_ptr.vmem [resolvable:$true] %s29
      %35 = dma.hbm_to_vmem [thread:$0]  %s1, 1024, %s30, [#allocation6], 64, 64, 4
    $region9: #{tpu_custom_call.1} parent=1 // pred_fallthru
      _
    // Predicated region
    $region10: #{tpu_custom_call.1} parent=1 // pred_check
      _
    $region11: #{tpu_custom_call.1} parent=1 // pred_check_branch
      %37 = sbr.rel (0) target = $region13
    $region12: #{tpu_custom_call.1} parent=1 // pred_region
      _
    $region13: #{tpu_custom_call.1} parent=1 // pred_fallthru
      _
    // Predicated region
    $region14: #{tpu_custom_call.1} parent=1 // pred_check
      _
    $region15: #{tpu_custom_call.1} parent=1 // pred_check_branch
      %39 = sbr.rel (0) target = $region17
    $region16: #{tpu_custom_call.1} parent=1 // pred_region
      %s41 = ssub.s32 1024, 1024
      %42 = vsyncadd [#allocation6], %s41
      %s43 = sshll.u32 [#allocation7], 4
      %s44 = int_to_ptr.vmem [resolvable:$true] %s43
      %49 = dma.hbm_to_vmem [thread:$0]  %s3, 1024, %s44, [#allocation6], 64, 64, 4
    $region17: #{tpu_custom_call.1} parent=1 // pred_fallthru
      _
    // Predicated region
    $region18: #{tpu_custom_call.1} parent=1 // pred_check
      _
    $region19: #{tpu_custom_call.1} parent=1 // pred_check_branch
      %51 = sbr.rel (0) target = $region21
    $region20: #{tpu_custom_call.1} parent=1 // pred_region
      _
    $region21: #{tpu_custom_call.1} parent=1 // pred_fallthru
      _
    // Predicated region
    $region22: #{tpu_custom_call.1} parent=1 // pred_check
      _
    $region23: #{tpu_custom_call.1} parent=1 // pred_check_branch
      %53 = sbr.rel (0) target = $region25
    $region24: #{tpu_custom_call.1} parent=1 // pred_region
      _
    $region25: #{tpu_custom_call.1} parent=1 // pred_fallthru
      _
    // Predicated region
    $region26: #{tpu_custom_call.1} parent=1 // pred_check
      _
    $region27: #{tpu_custom_call.1} parent=1 // pred_check_branch
      %55 = sbr.rel (0) target = $region29
    $region28: #{tpu_custom_call.1} parent=1 // pred_region
      %56 = dma.done [#allocation3], 64
    $region29: #{tpu_custom_call.1} parent=1 // pred_fallthru
      _
    // Predicated region
    $region30: #{tpu_custom_call.1} parent=1 // pred_check
      _
    $region31: #{tpu_custom_call.1} parent=1 // pred_check_branch
      %58 = sbr.rel (0) target = $region33
    $region32: #{tpu_custom_call.1} parent=1 // pred_region
      %59 = dma.done [#allocation6], 1024
    $region33: #{tpu_custom_call.1} parent=1 // pred_fallthru
      _
    // Predicated region
    $region34: #{tpu_custom_call.1} parent=1 // pred_check
      _
    $region35: #{tpu_custom_call.1} parent=1 // pred_check_branch
      %61 = sbr.rel (0) target = $region37
    $region36: #{tpu_custom_call.1} parent=1 // pred_region
      %62 = dma.done [#allocation6], 1024
    $region37: #{tpu_custom_call.1} parent=1 // pred_fallthru
      _
    %v64 = vld [vmem:[#allocation2] sm:$0xf]
    %v65 = vld [vmem:[#allocation5] sm:$0xf]
    %v66 = vld [vmem:[#allocation5 + $0x4] sm:$0xf]
    %v67 = vld [vmem:[#allocation5 + $0x8] sm:$0xf]
    %v68 = vld [vmem:[#allocation5 + $0xc] sm:$0xf]
    %v69 = vld [vmem:[#allocation5 + $0x10] sm:$0xf]
    %v70 = vld [vmem:[#allocation5 + $0x14] sm:$0xf]
    %v71 = vld [vmem:[#allocation5 + $0x18] sm:$0xf]
    %v72 = vld [vmem:[#allocation5 + $0x1c] sm:$0xf]
    %v73 = vld [vmem:[#allocation5 + $0x20] sm:$0xf]
    %v74 = vld [vmem:[#allocation5 + $0x24] sm:$0xf]
    %v75 = vld [vmem:[#allocation5 + $0x28] sm:$0xf]
    %v76 = vld [vmem:[#allocation5 + $0x2c] sm:$0xf]
    %v77 = vld [vmem:[#allocation5 + $0x30] sm:$0xf]
    %v78 = vld [vmem:[#allocation5 + $0x34] sm:$0xf]
    %v79 = vld [vmem:[#allocation5 + $0x38] sm:$0xf]
    %v80 = vld [vmem:[#allocation5 + $0x3c] sm:$0xf]
    %v81 = vld [vmem:[%s2] sm:$0x1]
    %v83 = vlaneseq
    %v84 = vshrl.u32 %v83, 7
    %v85 = vsub.s32 0, %v84
    %v86 = vrot.slane %v81, %v85
    %v104 = vunpack.c.l.b16 %v65
    %v105 = vunpack.c.l.b16 %v66
    %v106 = vunpack.c.l.b16 %v67
    %v107 = vunpack.c.l.b16 %v68
    %v108 = vunpack.c.l.b16 %v69
    %v109 = vunpack.c.l.b16 %v70
    %v110 = vunpack.c.l.b16 %v71
    %v111 = vunpack.c.l.b16 %v72
    %v112 = vunpack.c.l.b16 %v73
    %v113 = vunpack.c.l.b16 %v74
    %v114 = vunpack.c.l.b16 %v75
    %v115 = vunpack.c.l.b16 %v76
    %v116 = vunpack.c.l.b16 %v77
    %v117 = vunpack.c.l.b16 %v78
    %v118 = vunpack.c.l.b16 %v79
    %v119 = vunpack.c.l.b16 %v80
    %v120 = vpack.c.b16 %v105, %v104
    %v121 = vpack.c.b16 %v107, %v106
    %v122 = vpack.c.b16 %v109, %v108
    %v123 = vpack.c.b16 %v111, %v110
    %v124 = vpack.c.b16 %v113, %v112
    %v125 = vpack.c.b16 %v115, %v114
    %v126 = vpack.c.b16 %v117, %v116
    %v127 = vpack.c.b16 %v119, %v118
    %136 = vmatprep.subr.bf16.mxu0 0
    %137 = vmatpush1.bf16.msra.mxu0 %v120
    %138 = vmatprep.subr.bf16.mxu0 0
    %139 = vmatpush1.bf16.msra.mxu0 %v121
    %140 = vmatprep.subr.bf16.mxu0 0
    %141 = vmatpush1.bf16.msra.mxu0 %v122
    %142 = vmatprep.subr.bf16.mxu0 0
    %143 = vmatpush1.bf16.msra.mxu0 %v123
    %144 = vmatprep.subr.bf16.mxu0 0
    %145 = vmatpush1.bf16.msra.mxu0 %v124
    %146 = vmatprep.subr.bf16.mxu0 0
    %147 = vmatpush1.bf16.msra.mxu0 %v125
    %148 = vmatprep.subr.bf16.mxu0 0
    %149 = vmatpush1.bf16.msra.mxu0 %v126
    %150 = vmatprep.subr.bf16.mxu0 0
    %151 = vmatpush1.bf16.msra.mxu0 %v127
    %152 = vmatprep.subr.bf16.mxu0 0
    %153 = vmatpush1.bf16.msra.mxu0 0
    %154 = vmatprep.subr.bf16.mxu0 0
    %155 = vmatpush1.bf16.msra.mxu0 0
    %156 = vmatprep.subr.bf16.mxu0 0
    %157 = vmatpush1.bf16.msra.mxu0 0
    %158 = vmatprep.subr.bf16.mxu0 0
    %159 = vmatpush1.bf16.msra.mxu0 0
    %160 = vmatprep.subr.bf16.mxu0 0
    %161 = vmatpush1.bf16.msra.mxu0 0
    %162 = vmatprep.subr.bf16.mxu0 0
    %163 = vmatpush1.bf16.msra.mxu0 0
    %164 = vmatprep.subr.bf16.mxu0 0
    %165 = vmatpush1.bf16.msra.mxu0 0
    %166 = vmatprep.subr.bf16.mxu0 0
    %167 = vmatpush1.bf16.msra.mxu0 0
    %168 = vmatprep.mubr.bf16.mxu0 0
    %169 = vmatmul.mubr.bf16.gmra.mrb[0].mxu0 %v64
    %v170 = vpop.f32.mrb[0].mxu0
    %v171 = vadd.f32 %v86, %v170
    %v172 = vpop.f32.mrb[0].mxu0
    %v173 = vpop.f32.mrb[0].mxu0
    %v174 = vpop.f32.mrb[0].mxu0
    %175 = vdwg.mxu0
    %v176 = vmax.f32 %v171, 0.0
    %v177 = vpack.c.bf16 %v176, %v176
    %v178 = vld [vmem:[#allocation7] sm:$0xf]
    %v179 = vld [vmem:[#allocation7 + $0x4] sm:$0xf]
    %v180 = vld [vmem:[#allocation7 + $0x8] sm:$0xf]
    %v181 = vld [vmem:[#allocation7 + $0xc] sm:$0xf]
    %v182 = vld [vmem:[#allocation7 + $0x10] sm:$0xf]
    %v183 = vld [vmem:[#allocation7 + $0x14] sm:$0xf]
    %v184 = vld [vmem:[#allocation7 + $0x18] sm:$0xf]
    %v185 = vld [vmem:[#allocation7 + $0x1c] sm:$0xf]
    %v186 = vld [vmem:[#allocation7 + $0x20] sm:$0xf]
    %v187 = vld [vmem:[#allocation7 + $0x24] sm:$0xf]
    %v188 = vld [vmem:[#allocation7 + $0x28] sm:$0xf]
    %v189 = vld [vmem:[#allocation7 + $0x2c] sm:$0xf]
    %v190 = vld [vmem:[#allocation7 + $0x30] sm:$0xf]
    %v191 = vld [vmem:[#allocation7 + $0x34] sm:$0xf]
    %v192 = vld [vmem:[#allocation7 + $0x38] sm:$0xf]
    %v193 = vld [vmem:[#allocation7 + $0x3c] sm:$0xf]
    %v194 = vld [vmem:[%s4] sm:$0x1]
    %v196 = vlaneseq
    %v197 = vshrl.u32 %v196, 7
    %v198 = vsub.s32 0, %v197
    %v199 = vrot.slane %v194, %v198
    %v217 = vunpack.c.l.b16 %v178
    %v218 = vunpack.c.l.b16 %v179
    %v219 = vunpack.c.l.b16 %v180
    %v220 = vunpack.c.l.b16 %v181
    %v221 = vunpack.c.l.b16 %v182
    %v222 = vunpack.c.l.b16 %v183
    %v223 = vunpack.c.l.b16 %v184
    %v224 = vunpack.c.l.b16 %v185
    %v225 = vunpack.c.l.b16 %v186
    %v226 = vunpack.c.l.b16 %v187
    %v227 = vunpack.c.l.b16 %v188
    %v228 = vunpack.c.l.b16 %v189
    %v229 = vunpack.c.l.b16 %v190
    %v230 = vunpack.c.l.b16 %v191
    %v231 = vunpack.c.l.b16 %v192
    %v232 = vunpack.c.l.b16 %v193
    %v233 = vpack.c.b16 %v218, %v217
    %v234 = vpack.c.b16 %v220, %v219
    %v235 = vpack.c.b16 %v222, %v221
    %v236 = vpack.c.b16 %v224, %v223
    %v237 = vpack.c.b16 %v226, %v225
    %v238 = vpack.c.b16 %v228, %v227
    %v239 = vpack.c.b16 %v230, %v229
    %v240 = vpack.c.b16 %v232, %v231
    %249 = vmatprep.subr.bf16.mxu0 0
    %250 = vmatpush1.bf16.msra.mxu0 %v233
    %251 = vmatprep.subr.bf16.mxu0 0
    %252 = vmatpush1.bf16.msra.mxu0 %v234
    %253 = vmatprep.subr.bf16.mxu0 0
    %254 = vmatpush1.bf16.msra.mxu0 %v235
    %255 = vmatprep.subr.bf16.mxu0 0
    %256 = vmatpush1.bf16.msra.mxu0 %v236
    %257 = vmatprep.subr.bf16.mxu0 0
    %258 = vmatpush1.bf16.msra.mxu0 %v237
    %259 = vmatprep.subr.bf16.mxu0 0
    %260 = vmatpush1.bf16.msra.mxu0 %v238
    %261 = vmatprep.subr.bf16.mxu0 0
    %262 = vmatpush1.bf16.msra.mxu0 %v239
    %263 = vmatprep.subr.bf16.mxu0 0
    %264 = vmatpush1.bf16.msra.mxu0 %v240
    %265 = vmatprep.subr.bf16.mxu0 0
    %266 = vmatpush1.bf16.msra.mxu0 0
    %267 = vmatprep.subr.bf16.mxu0 0
    %268 = vmatpush1.bf16.msra.mxu0 0
    %269 = vmatprep.subr.bf16.mxu0 0
    %270 = vmatpush1.bf16.msra.mxu0 0
    %271 = vmatprep.subr.bf16.mxu0 0
    %272 = vmatpush1.bf16.msra.mxu0 0
    %273 = vmatprep.subr.bf16.mxu0 0
    %274 = vmatpush1.bf16.msra.mxu0 0
    %275 = vmatprep.subr.bf16.mxu0 0
    %276 = vmatpush1.bf16.msra.mxu0 0
    %277 = vmatprep.subr.bf16.mxu0 0
    %278 = vmatpush1.bf16.msra.mxu0 0
    %279 = vmatprep.subr.bf16.mxu0 0
    %280 = vmatpush1.bf16.msra.mxu0 0
    %281 = vmatprep.mubr.bf16.mxu0 0
    %282 = vmatmul.mubr.bf16.gmra.mrb[0].mxu0 %v177
    %v283 = vpop.f32.mrb[0].mxu0
    %v284 = vadd.f32 %v199, %v283
    %v285 = vpop.f32.mrb[0].mxu0
    %v286 = vpop.f32.mrb[0].mxu0
    %v287 = vpop.f32.mrb[0].mxu0
    %288 = vdwg.mxu0
    %v289 = vld [vmem:[%s5] sm:$0xff]
    %v290 = vadd.f32 %v284, %v289
    %291 = vst [vmem:[#allocation8] sm:$0xff] %v290
    // Predicated region
    $region38: #{tpu_custom_call.1} parent=1 // pred_check
      _
    $region39: #{tpu_custom_call.1} parent=1 // pred_check_branch
      %293 = sbr.rel (0) target = $region41
    $region40: #{tpu_custom_call.1} parent=1 // pred_region
      %s295 = ssub.s32 128, 128
      %296 = vsyncadd [#allocation4], %s295
      %s298 = sshll.u32 [#allocation8], 4
      %s299 = int_to_ptr.vmem [resolvable:$true] %s298
      %301 = dma.vmem_to_hbm [thread:$0]  %s299, 128, %s6, [#allocation4]
    $region41: #{tpu_custom_call.1} parent=1 // pred_fallthru
      _
    // Predicated region
    $region42: #{tpu_custom_call.1} parent=1 // pred_check
      _
    $region43: #{tpu_custom_call.1} parent=1 // pred_check_branch
      %303 = sbr.rel (0) target = $region45
    $region44: #{tpu_custom_call.1} parent=1 // pred_region
      %304 = dma.done [#allocation4], 128
    $region45: #{tpu_custom_call.1} parent=1 // pred_fallthru
      _
    %305 = vsyncpa [#allocation3], 1
    %306 = vsyncpa [#allocation6], 1
    %307 = vsyncpa [#allocation4], 1

</llo_original>
